<compile_context>
chip_gen: v5e
topology: v5e:2x2
jax: 0.10.0
libtpu: 0.0.40
codegen_flags: <defaults>
</compile_context>

<pallas_src>
import functools

import jax
import jax.numpy as jnp
from jax.experimental import pallas as pl
from jax.experimental.pallas import tpu as pltpu

_LANES = 128
_ACC_ROWS = 32  # accumulator sublanes: breaks the VALU dep chain and covers
                # the worst-case min sublane tile (f32:8 / bf16:16 / int8:32).


def _bce_kernel(pred_ref, target_ref, out_ref, acc_ref, *,
                total_blocks, blocks_per_split, binary_targets):
    s = pl.program_id(0)   # split axis ("parallel": TensorCores on v7x)
    k = pl.program_id(1)   # streaming reduction axis ("arbitrary")

    @pl.when(k == 0)
    def _():
        acc_ref[...] = jnp.zeros_like(acc_ref)

    # Gate redundant clamped blocks of an uneven last split with a whole-body
    # pl.when: no per-element mask, no wasted compute on duplicate blocks.
    @pl.when(s * blocks_per_split + k < total_blocks)
    def _():
        # Cast in-kernel (VPU); the DMA moved the native dtype.
        p = pred_ref[...].astype(jnp.float32)
        t = target_ref[...].astype(jnp.float32)
        if binary_targets:
            # Opt-in fast path (targets strictly in {0,1}): one log/element.
            contrib = jnp.maximum(
                jnp.log(jnp.where(t >= 0.5, p, 1.0 - p)), jnp.float32(-100.0))
        else:
            # PyTorch BCELoss clamps each log term at -100; log1p(-p) keeps
            # precision for small p.  Trimmed form:
            #   log1mp + t*(log_p - log1mp) == t*log_p + (1-t)*log1mp
            # Negation is folded into the per-split finalize.
            log_p = jnp.maximum(jnp.log(p), jnp.float32(-100.0))
            log_1mp = jnp.maximum(jnp.log1p(-p), jnp.float32(-100.0))
            contrib = log_1mp + t * (log_p - log_1mp)
        # Lane-parallel accumulation into a wide vreg-shaped accumulator:
        # the reshape groups whole (32,128) slabs so the axis-0 reduce is pure
        # element-wise VPU adds (no XLU, no scalar RMW per step).
        acc_ref[...] += contrib.reshape(-1, _ACC_ROWS, _LANES).sum(axis=0)

    @pl.when(k == pl.num_programs(1) - 1)
    def _():
        # Single XLU reduce + negation, once per split.
        out_ref[0, 0] = -jnp.sum(acc_ref[...])


def _num_tensorcores_per_chip() -> int:
    # Shard the split axis across TensorCores only on multi-TC chips (v7x).
    # On single-TC chips (v5e/v6e) a split is just a serial outer loop.
    try:
        return max(1, min(2, int(getattr(jax.devices()[0], "num_cores", 1))))
    except Exception:
        return 1


def bce_loss(pred, target, *, tile_rows=4096, num_splits=None,
             binary_targets=False):
    """Mean BCE over all elements == nn.BCELoss()(pred.view(B,-1), target.view(B,-1))."""
    assert pred.shape == target.shape
    n = pred.size  # true element count for the mean

    if num_splits is None:
        num_splits = _num_tensorcores_per_chip()

    # Keep native dtype for the DMA (cast to f32 in-kernel on the VPU).
    p_flat = pred.reshape(-1)
    t_flat = target.reshape(-1)

    rows_raw = pl.cdiv(n, _LANES)
    # Block rows: a multiple of _ACC_ROWS (satisfies (8/16/32, 128) tiling for
    # any dtype), never much larger than the data itself.
    tile_rows = min(int(tile_rows), rows_raw + _ACC_ROWS - 1)
    tile_rows = max(_ACC_ROWS, (tile_rows // _ACC_ROWS) * _ACC_ROWS)

    # Pad to a whole number of blocks with (pred=1, target=1): those elements
    # contribute exactly zero loss, so no in-kernel edge masking is needed.
    padded_rows = pl.cdiv(rows_raw, tile_rows) * tile_rows
    pad = padded_rows * _LANES - n
    if pad:
        p_flat = jnp.pad(p_flat, (0, pad),
                         constant_values=jnp.ones((), dtype=pred.dtype))
        t_flat = jnp.pad(t_flat, (0, pad),
                         constant_values=jnp.ones((), dtype=target.dtype))

    p2d = p_flat.reshape(padded_rows, _LANES)
    t2d = t_flat.reshape(padded_rows, _LANES)

    total_blocks = padded_rows // tile_rows
    num_splits = max(1, min(int(num_splits), total_blocks))
    blocks_per_split = pl.cdiv(total_blocks, num_splits)
    num_splits = pl.cdiv(total_blocks, blocks_per_split)  # drop empty splits

    def in_map(s, k):
        # Clamp so every grid step maps to a valid block; redundant clamped
        # blocks are skipped by the whole-body pl.when in the kernel.
        return (jnp.minimum(s * blocks_per_split + k, total_blocks - 1), 0)

    # Raise the scoped-VMEM limit only when large tiles need it
    # (2 inputs x 2 pipeline buffers; v5e default scoped VMEM is 16 MiB).
    tile_bytes = tile_rows * _LANES * jnp.dtype(pred.dtype).itemsize
    needed = 4 * tile_bytes + (2 << 20)
    cp_kwargs = dict(dimension_semantics=("parallel", "arbitrary"))
    if needed > (16 << 20):
        cp_kwargs["vmem_limit_bytes"] = needed

    partials = pl.pallas_call(
        functools.partial(
            _bce_kernel,
            total_blocks=total_blocks,
            blocks_per_split=blocks_per_split,
            binary_targets=binary_targets,
        ),
        out_shape=jax.ShapeDtypeStruct((num_splits, 1), jnp.float32),
        grid_spec=pltpu.PrefetchScalarGridSpec(
            num_scalar_prefetch=0,
            grid=(num_splits, blocks_per_split),
            in_specs=[
                pl.BlockSpec((tile_rows, _LANES), in_map),
                pl.BlockSpec((tile_rows, _LANES), in_map),
            ],
            out_specs=pl.BlockSpec(
                (1, 1), lambda s, k: (s, 0),
                memory_space=pltpu.MemorySpace.SMEM),
            scratch_shapes=[pltpu.VMEM((_ACC_ROWS, _LANES), jnp.float32)],
        ),
        compiler_params=pltpu.CompilerParams(**cp_kwargs),
    )(p2d, t2d)

    # Tiny combine + mean over the TRUE element count outside the kernel.
    return jnp.sum(partials) / jnp.float32(n)


def _reference_bce(pred, target):
    p = pred.astype(jnp.float32)
    t = target.astype(jnp.float32)
    log_p = jnp.maximum(jnp.log(p), -100.0)
    log_1mp = jnp.maximum(jnp.log1p(-p), -100.0)
    return jnp.mean(-(t * log_p + (1.0 - t) * log_1mp))


if __name__ == "__main__":
    key = jax.random.PRNGKey(0)

    # Main test: NCHW-shaped inputs consistent with a segmentation-style BCE.
    k1, k2, key = jax.random.split(key, 3)
    shape = (2, 4, 16, 16)
    pred = jax.nn.sigmoid(jax.random.normal(k1, shape, dtype=jnp.float32))
    target = (jax.random.uniform(k2, shape) > 0.5).astype(jnp.float32)
    loss = bce_loss(pred, target)
    jax.block_until_ready(loss)
    ref = _reference_bce(pred, target)
    assert jnp.allclose(loss, ref, atol=1e-5, rtol=1e-5), (loss, ref)

    # Unaligned element count: exercises the pad-with-ones (zero-loss) path.
    k1, k2, key = jax.random.split(key, 3)
    shape_u = (2, 3, 7, 9)
    pred_u = jax.nn.sigmoid(jax.random.normal(k1, shape_u, dtype=jnp.float32))
    target_u = (jax.random.uniform(k2, shape_u) > 0.5).astype(jnp.float32)
    loss_u = bce_loss(pred_u, target_u)
    jax.block_until_ready(loss_u)
    ref_u = _reference_bce(pred_u, target_u)
    assert jnp.allclose(loss_u, ref_u, atol=1e-5, rtol=1e-5), (loss_u, ref_u)

    # Multi-block / multi-split path: 3 blocks, 2 splits -> one gated
    # (clamped duplicate) block in the second split.
    k1, k2, key = jax.random.split(key, 3)
    shape_s = (2, 4, 32, 48)  # 12288 elems -> 96 rows -> 3 blocks of 32 rows
    pred_s = jax.nn.sigmoid(jax.random.normal(k1, shape_s, dtype=jnp.float32))
    target_s = (jax.random.uniform(k2, shape_s) > 0.5).astype(jnp.float32)
    loss_s = bce_loss(pred_s, target_s, tile_rows=32, num_splits=2)
    jax.block_until_ready(loss_s)
    ref_s = _reference_bce(pred_s, target_s)
    assert jnp.allclose(loss_s, ref_s, atol=1e-5, rtol=1e-5), (loss_s, ref_s)

    # Opt-in binary-target fast path (one log per element).
    loss_b = bce_loss(pred, target, binary_targets=True)
    jax.block_until_ready(loss_b)
    assert jnp.allclose(loss_b, ref, atol=1e-5, rtol=1e-5), (loss_b, ref)

    print("KERNEL_OK")
</pallas_src>

<mosaic_0001>
module attributes {stable_mosaic.version = 11 : i64} {
  func.func @_bce_kernel(%arg0: i32, %arg1: i32, %arg2: memref<32x128xf32, #tpu.memory_space<vmem>>, %arg3: memref<32x128xf32, #tpu.memory_space<vmem>>, %arg4: memref<1x1xf32, #tpu.memory_space<smem>>, %arg5: memref<32x128xf32, #tpu.memory_space<vmem>>) attributes {dimension_semantics = [#tpu.dimension_semantics<parallel>, #tpu.dimension_semantics<arbitrary>], iteration_bounds = array<i64: 1, 1>, scalar_prefetch = 0 : i64, scratch_operands = 1 : i64, tpu.core_type = #tpu.core_type<tc>, window_params = [{transform_indices = @transform_0, window_bounds = array<i64: 32, 128>}, {transform_indices = @transform_1, window_bounds = array<i64: 32, 128>}, {transform_indices = @transform_2, window_bounds = array<i64: 1, 1>}]} {
    %c0_i32 = arith.constant 0 : i32
    %0 = arith.cmpi eq, %arg1, %c0_i32 : i32
    %1 = arith.extui %0 : i1 to i32
    %c0_i32_0 = arith.constant 0 : i32
    %2 = arith.cmpi ne, %1, %c0_i32_0 : i32
    scf.if %2 {
      %cst = arith.constant 0.000000e+00 : f32
      %11 = vector.broadcast %cst : f32 to vector<32x128xf32>
      %c0 = arith.constant 0 : index
      %c0_5 = arith.constant 0 : index
      %12 = vector.load %arg5[%c0, %c0_5] : memref<32x128xf32, #tpu.memory_space<vmem>>, vector<32x128xf32>
      tpu.vector_store %arg5[%c0, %c0_5], %11 {strides = array<i32>} : memref<32x128xf32, #tpu.memory_space<vmem>>, vector<32x128xf32>,
    } else {
    }
    %c1_i32 = arith.constant 1 : i32
    %3 = arith.muli %arg0, %c1_i32 : i32
    %4 = arith.addi %3, %arg1 : i32
    %c1_i32_1 = arith.constant 1 : i32
    %5 = arith.cmpi slt, %4, %c1_i32_1 : i32
    %6 = arith.extui %5 : i1 to i32
    %c0_i32_2 = arith.constant 0 : i32
    %7 = arith.cmpi ne, %6, %c0_i32_2 : i32
    scf.if %7 {
      %c0 = arith.constant 0 : index
      %c0_5 = arith.constant 0 : index
      %11 = vector.load %arg2[%c0, %c0_5] : memref<32x128xf32, #tpu.memory_space<vmem>>, vector<32x128xf32>
      %c0_6 = arith.constant 0 : index
      %c0_7 = arith.constant 0 : index
      %12 = vector.load %arg3[%c0_6, %c0_7] : memref<32x128xf32, #tpu.memory_space<vmem>>, vector<32x128xf32>
      %13 = math.log %11 : vector<32x128xf32>
      %cst = arith.constant -1.000000e+02 : f32
      %14 = vector.broadcast %cst : f32 to vector<32x128xf32>
      %15 = arith.maximumf %13, %14 : vector<32x128xf32>
      %cst_8 = arith.constant 0.000000e+00 : f32
      %16 = vector.broadcast %cst_8 : f32 to vector<32x128xf32>
      %17 = arith.subf %16, %11 : vector<32x128xf32>
      %18 = math.log1p %17 : vector<32x128xf32>
      %cst_9 = arith.constant -1.000000e+02 : f32
      %19 = vector.broadcast %cst_9 : f32 to vector<32x128xf32>
      %20 = arith.maximumf %18, %19 : vector<32x128xf32>
      %21 = arith.subf %15, %20 : vector<32x128xf32>
      %22 = arith.mulf %12, %21 : vector<32x128xf32>
      %23 = arith.addf %20, %22 : vector<32x128xf32>
      %c0_10 = arith.constant 0 : index
      %c0_11 = arith.constant 0 : index
      %24 = vector.load %arg5[%c0_10, %c0_11] : memref<32x128xf32, #tpu.memory_space<vmem>>, vector<32x128xf32>
      %25 = vector.shape_cast %23 : vector<32x128xf32> to vector<1x32x128xf32>
      %cst_12 = arith.constant dense<0.000000e+00> : vector<32x128xf32>
      %26 = vector.multi_reduction <add>, %25, %cst_12 [0] : vector<1x32x128xf32> to vector<32x128xf32>
      %27 = arith.addf %24, %26 : vector<32x128xf32>
      %c0_13 = arith.constant 0 : index
      %c0_14 = arith.constant 0 : index
      %28 = vector.load %arg5[%c0_13, %c0_14] : memref<32x128xf32, #tpu.memory_space<vmem>>, vector<32x128xf32>
      tpu.vector_store %arg5[%c0_13, %c0_14], %27 {strides = array<i32>} : memref<32x128xf32, #tpu.memory_space<vmem>>, vector<32x128xf32>,
    } else {
    }
    %c0_i32_3 = arith.constant 0 : i32
    %8 = arith.cmpi eq, %arg1, %c0_i32_3 : i32
    %9 = arith.extui %8 : i1 to i32
    %c0_i32_4 = arith.constant 0 : i32
    %10 = arith.cmpi ne, %9, %c0_i32_4 : i32
    scf.if %10 {
      %c0 = arith.constant 0 : index
      %c0_5 = arith.constant 0 : index
      %11 = vector.load %arg5[%c0, %c0_5] : memref<32x128xf32, #tpu.memory_space<vmem>>, vector<32x128xf32>
      %12 = vector.shape_cast %11 : vector<32x128xf32> to vector<1x32x128xf32>
      %cst = arith.constant dense<0.000000e+00> : vector<1xf32>
      %13 = vector.multi_reduction <add>, %12, %cst [1, 2] : vector<1x32x128xf32> to vector<1xf32>
      %14 = vector.shape_cast %13 : vector<1xf32> to vector<1x1x1xf32>
      %15 = vector.extract %14[0, 0, 0] : f32 from vector<1x1x1xf32>
      %cst_6 = arith.constant 0.000000e+00 : f32
      %16 = arith.subf %cst_6, %15 : f32
      %c0_7 = arith.constant 0 : index
      %c0_8 = arith.constant 0 : index
      %17 = memref.load %arg4[%c0_7, %c0_8] : memref<1x1xf32, #tpu.memory_space<smem>>
      memref.store %16, %arg4[%c0_7, %c0_8] : memref<1x1xf32, #tpu.memory_space<smem>>
    } else {
    }
    return
  }
  func.func @transform_0(%arg0: i32, %arg1: i32) -> (i32, i32) {
    %c1_i32 = arith.constant 1 : i32
    %0 = arith.muli %arg0, %c1_i32 : i32
    %1 = arith.addi %0, %arg1 : i32
    %c0_i32 = arith.constant 0 : i32
    %2 = arith.minsi %1, %c0_i32 : i32
    %c0_i32_0 = arith.constant 0 : i32
    %c0_i32_1 = arith.constant 0 : i32
    return %2, %c0_i32_0 : i32, i32
  }
  func.func @transform_1(%arg0: i32, %arg1: i32) -> (i32, i32) {
    %c1_i32 = arith.constant 1 : i32
    %0 = arith.muli %arg0, %c1_i32 : i32
    %1 = arith.addi %0, %arg1 : i32
    %c0_i32 = arith.constant 0 : i32
    %2 = arith.minsi %1, %c0_i32 : i32
    %c0_i32_0 = arith.constant 0 : i32
    %c0_i32_1 = arith.constant 0 : i32
    return %2, %c0_i32_0 : i32, i32
  }
  func.func @transform_2(%arg0: i32, %arg1: i32) -> (i32, i32) {
    %c0_i32 = arith.constant 0 : i32
    %c0_i32_0 = arith.constant 0 : i32
    return %arg0, %c0_i32 : i32, i32
  }
}

</mosaic_0001>

<llo_original>
// kernel: tpu_custom_call.1
$region0: #{tpu_custom_call.1}
  #allocation0 [shape = 'u32[]', space=smem, size = 0x4, offset = 0x4, fixed_abs, tag = 'smem constant byte address 0x4 - core index']
  #allocation1 [shape = 'u32[72,128]{1,0:T(1,128)}', space=vmem, size = 0x9000, scoped, tag = 'internal scratch']
  #allocation2 [shape = 'f32[32,128]{1,0:T(8,128)}', space=vmem, size = 0x4000, scoped, tag = 'scratch operand']
  %s0 = inlined_call_operand.hbm [shape: f32[32,128], index: 0, kind: input, shape index: {}]
  %s1 = inlined_call_operand.hbm [shape: f32[32,128], index: 1, kind: input, shape index: {}]
  %s2 = inlined_call_operand.hbm [shape: f32[1,1], index: 2, kind: output, shape index: {}]
  %s3 = sld [smem:[#allocation0]]
  $region38: #{tpu_custom_call.1} parent=0
    _
  %s5 = ssub.s32 1, %s3
  %s6 = scalar_select 0, %s5, %s3
  $region1: #{tpu_custom_call.1} parent=0
    #allocation3 [shape = 'u8[16384]{0}', space=vmem, size = 0x4000, scoped, tag = 'input window, operand 0, single buffered']
    #allocation4 [shape = 's32[1]{0}', space=sflag, size = 0x4, scoped, tag = 'scoped memory for tpu_custom_call.1']
    #allocation5 [shape = 's32[1]{0}', space=sflag, size = 0x4, scoped, tag = 'scoped memory for tpu_custom_call.1']
    #allocation6 [shape = 'u8[16384]{0}', space=vmem, size = 0x4000, scoped, tag = 'input window, operand 1, single buffered']
    #allocation7 [shape = 's32[1]{0}', space=sflag, size = 0x4, scoped, tag = 'scoped memory for tpu_custom_call.1']
    #allocation8 [shape = 'u8[512]{0}', space=smem, size = 0x200, scoped, tag = 'output window, operand 0, single buffered']
    %7 = vsyncpa [#allocation4], 0
    %8 = vsyncpa [#allocation7], 0
    %9 = vsyncpa [#allocation5], 0
    // Predicated region
    $region2: #{tpu_custom_call.1} parent=1 // pred_check
      _
    $region3: #{tpu_custom_call.1} parent=1 // pred_check_branch
      %11 = sbr.rel (0) target = $region5
    $region4: #{tpu_custom_call.1} parent=1 // pred_region
      %s12 = sadd.s32 0, 0
      %p13 = scmp.lt.s32.totalorder %s12, 0
      %s14 = scalar_select %p13, %s12, 0
      %s15 = smul.u32 4, %s14
      %17 = vsyncadd [#allocation4], 0
      %s18 = smul.addr %s15, 8
      %s19 = scalar_lea.hbm %s0, %s18
      %s20 = sshll.u32 %s19, 4
      %s21 = int_to_ptr.hbm [resolvable:$true] %s20
      %s22 = sshll.u32 [#allocation3], 4
      %s23 = int_to_ptr.vmem [resolvable:$true] %s22
      %28 = dma.hbm_to_vmem [thread:$0]  %s21, 512, %s23, [#allocation4], 128, 128, 8
    $region5: #{tpu_custom_call.1} parent=1 // pred_fallthru
      _
    // Predicated region
    $region6: #{tpu_custom_call.1} parent=1 // pred_check
      _
    $region7: #{tpu_custom_call.1} parent=1 // pred_check_branch
      %30 = sbr.rel (0) target = $region9
    $region8: #{tpu_custom_call.1} parent=1 // pred_region
      %s31 = sadd.s32 0, 0
      %p32 = scmp.lt.s32.totalorder %s31, 0
      %s33 = scalar_select %p32, %s31, 0
      %s34 = smul.u32 4, %s33
      %36 = vsyncadd [#allocation7], 0
      %s37 = smul.addr %s34, 8
      %s38 = scalar_lea.hbm %s1, %s37
      %s39 = sshll.u32 %s38, 4
      %s40 = int_to_ptr.hbm [resolvable:$true] %s39
      %s41 = sshll.u32 [#allocation6], 4
      %s42 = int_to_ptr.vmem [resolvable:$true] %s41
      %47 = dma.hbm_to_vmem [thread:$0]  %s40, 512, %s42, [#allocation7], 128, 128, 8
    $region9: #{tpu_custom_call.1} parent=1 // pred_fallthru
      _
    // Predicated region
    $region10: #{tpu_custom_call.1} parent=1 // pred_check
      _
    $region11: #{tpu_custom_call.1} parent=1 // pred_check_branch
      %49 = sbr.rel (0) target = $region13
    $region12: #{tpu_custom_call.1} parent=1 // pred_region
      %51 = dma.done [#allocation4], 512
    $region13: #{tpu_custom_call.1} parent=1 // pred_fallthru
      _
    // Predicated region
    $region14: #{tpu_custom_call.1} parent=1 // pred_check
      _
    $region15: #{tpu_custom_call.1} parent=1 // pred_check_branch
      %53 = sbr.rel (0) target = $region17
    $region16: #{tpu_custom_call.1} parent=1 // pred_region
      %55 = dma.done [#allocation7], 512
    $region17: #{tpu_custom_call.1} parent=1 // pred_fallthru
      _
    %s56 = sadd.s32 0, 0
    %p57 = scmp.lt.s32.totalorder %s56, 0
    %s58 = scalar_select %p57, %s56, 0
    %s59 = smul.u32 4, %s58
    %s60 = sadd.s32 0, 0
    %p61 = scmp.lt.s32.totalorder %s60, 0
    %s62 = scalar_select %p61, %s60, 0
    %s63 = smul.u32 4, %s62
    %p64 = scmp.eq.s32.totalorder 0, 0
    // Predicated region
    $region18: #{tpu_custom_call.1} parent=1 // pred_check
      %p65 = pneg %p64
    $region19: #{tpu_custom_call.1} parent=1 // pred_check_branch
      %67 = sbr.rel (%p65) target = $region21
    $region20: #{tpu_custom_call.1} parent=1 // pred_region
      %68 = vst [vmem:[#allocation2] sm:$0xff] 0.0
      %69 = vst [vmem:[#allocation2 + $0x8] sm:$0xff] 0.0
      %70 = vst [vmem:[#allocation2 + $0x10] sm:$0xff] 0.0
      %71 = vst [vmem:[#allocation2 + $0x18] sm:$0xff] 0.0
    $region21: #{tpu_custom_call.1} parent=1 // pred_fallthru
      _
    %s72 = sadd.s32 0, 0
    %p73 = scmp.lt.s32.totalorder %s72, 1
    // Predicated region
    $region22: #{tpu_custom_call.1} parent=1 // pred_check
      %p74 = pneg %p73
    $region23: #{tpu_custom_call.1} parent=1 // pred_check_branch
      %76 = sbr.rel (%p74) target = $region25
    $region24: #{tpu_custom_call.1} parent=1 // pred_region
      %v77 = vld [vmem:[#allocation3] sm:$0xff]
      %v78 = vld [vmem:[#allocation3 + $0x8] sm:$0xff]
      %v79 = vld [vmem:[#allocation3 + $0x10] sm:$0xff]
      %v80 = vld [vmem:[#allocation3 + $0x18] sm:$0xff]
      %v81 = vld [vmem:[#allocation6] sm:$0xff]
      %v82 = vld [vmem:[#allocation6 + $0x8] sm:$0xff]
      %v83 = vld [vmem:[#allocation6 + $0x10] sm:$0xff]
      %v84 = vld [vmem:[#allocation6 + $0x18] sm:$0xff]
      %v85 = vlog2.pop %v77
      %v86 = vmul.f32 %v85, 0.6931472
      %v87 = vlog2.pop %v78
      %v88 = vmul.f32 %v87, 0.6931472
      %v89 = vlog2.pop %v79
      %v90 = vmul.f32 %v89, 0.6931472
      %v91 = vlog2.pop %v80
      %v92 = vmul.f32 %v91, 0.6931472
      %v93 = vmax.f32 %v86, -100.0
      %v94 = vmax.f32 %v88, -100.0
      %v95 = vmax.f32 %v90, -100.0
      %v96 = vmax.f32 %v92, -100.0
      %v97 = vsub.f32 0.0, %v77
      %v98 = vsub.f32 0.0, %v78
      %v99 = vsub.f32 0.0, %v79
      %v100 = vsub.f32 0.0, %v80
      %v101 = vadd.f32 %v97, 1.0
      %v102 = vlog2.pop %v101
      %v103 = vmul.f32 %v102, 0.6931472
      %v104 = vmul.f32 -0.5, %v97
      %v105 = vadd.f32 %v104, 1.0
      %v106 = vmul.f32 %v105, %v97
      %v107 = vand.u32 2147483647, %v97
      %vm108 = vcmp.lt.f32.partialorder %v107, 0.0004427343
      %v109 = vsel %vm108, %v106, %v103
      %v110 = vadd.f32 %v98, 1.0
      %v111 = vlog2.pop %v110
      %v112 = vmul.f32 %v111, 0.6931472
      %v113 = vmul.f32 -0.5, %v98
      %v114 = vadd.f32 %v113, 1.0
      %v115 = vmul.f32 %v114, %v98
      %v116 = vand.u32 2147483647, %v98
      %vm117 = vcmp.lt.f32.partialorder %v116, 0.0004427343
      %v118 = vsel %vm117, %v115, %v112
      %v119 = vadd.f32 %v99, 1.0
      %v120 = vlog2.pop %v119
      %v121 = vmul.f32 %v120, 0.6931472
      %v122 = vmul.f32 -0.5, %v99
      %v123 = vadd.f32 %v122, 1.0
      %v124 = vmul.f32 %v123, %v99
      %v125 = vand.u32 2147483647, %v99
      %vm126 = vcmp.lt.f32.partialorder %v125, 0.0004427343
      %v127 = vsel %vm126, %v124, %v121
      %v128 = vadd.f32 %v100, 1.0
      %v129 = vlog2.pop %v128
      %v130 = vmul.f32 %v129, 0.6931472
      %v131 = vmul.f32 -0.5, %v100
      %v132 = vadd.f32 %v131, 1.0
      %v133 = vmul.f32 %v132, %v100
      %v134 = vand.u32 2147483647, %v100
      %vm135 = vcmp.lt.f32.partialorder %v134, 0.0004427343
      %v136 = vsel %vm135, %v133, %v130
      %v137 = vmax.f32 %v109, -100.0
      %v138 = vmax.f32 %v118, -100.0
      %v139 = vmax.f32 %v127, -100.0
      %v140 = vmax.f32 %v136, -100.0
      %v141 = vsub.f32 %v93, %v137
      %v142 = vsub.f32 %v94, %v138
      %v143 = vsub.f32 %v95, %v139
      %v144 = vsub.f32 %v96, %v140
      %v145 = vmul.f32 %v81, %v141
      %v146 = vmul.f32 %v82, %v142
      %v147 = vmul.f32 %v83, %v143
      %v148 = vmul.f32 %v84, %v144
      %v149 = vadd.f32 %v137, %v145
      %v150 = vadd.f32 %v138, %v146
      %v151 = vadd.f32 %v139, %v147
      %v152 = vadd.f32 %v140, %v148
      %v153 = vld [vmem:[#allocation2] sm:$0xff]
      %v154 = vld [vmem:[#allocation2 + $0x8] sm:$0xff]
      %v155 = vld [vmem:[#allocation2 + $0x10] sm:$0xff]
      %v156 = vld [vmem:[#allocation2 + $0x18] sm:$0xff]
      %v157 = vadd.f32 %v149, 0.0
      %v158 = vadd.f32 %v150, 0.0
      %v159 = vadd.f32 %v151, 0.0
      %v160 = vadd.f32 %v152, 0.0
      %v161 = vadd.f32 %v153, %v157
      %v162 = vadd.f32 %v154, %v158
      %v163 = vadd.f32 %v155, %v159
      %v164 = vadd.f32 %v156, %v160
      %165 = vst [vmem:[#allocation2] sm:$0xff] %v161
      %166 = vst [vmem:[#allocation2 + $0x8] sm:$0xff] %v162
      %167 = vst [vmem:[#allocation2 + $0x10] sm:$0xff] %v163
      %168 = vst [vmem:[#allocation2 + $0x18] sm:$0xff] %v164
    $region25: #{tpu_custom_call.1} parent=1 // pred_fallthru
      _
    // Predicated region
    $region26: #{tpu_custom_call.1} parent=1 // pred_check
      %p169 = pneg %p64
    $region27: #{tpu_custom_call.1} parent=1 // pred_check_branch
      %171 = sbr.rel (%p169) target = $region29
    $region28: #{tpu_custom_call.1} parent=1 // pred_region
      %v172 = vld [vmem:[#allocation2] sm:$0xff]
      %v173 = vld [vmem:[#allocation2 + $0x8] sm:$0xff]
      %v174 = vld [vmem:[#allocation2 + $0x10] sm:$0xff]
      %v175 = vld [vmem:[#allocation2 + $0x18] sm:$0xff]
      %v176 = vadd.f32 %v172, %v173
      %v177 = vadd.f32 %v176, %v174
      %v178 = vadd.f32 %v177, %v175
      %179 = vadd.xlane.f32.xlu0 %v178
      %v180 = vpop.xlane.xlu0 %179
      %v181 = vrot.slane %v180, 4
      %v182 = vadd.f32 %v180, %v181
      %v183 = vrot.slane %v182, 2
      %v184 = vadd.f32 %v182, %v183
      %v185 = vrot.slane %v184, 1
      %v186 = vadd.f32 %v184, %v185
      %s187 = vtos %v186
      %s188 = ssub.f32 0.0, %s187
      %s189 = scalar_lea.smem [#allocation8], 0
      %190 = sst [smem:[%s189]] %s188
    $region29: #{tpu_custom_call.1} parent=1 // pred_fallthru
      _
    // Predicated region
    $region30: #{tpu_custom_call.1} parent=1 // pred_check
      _
    $region31: #{tpu_custom_call.1} parent=1 // pred_check_branch
      %192 = sbr.rel (0) target = $region33
    $region32: #{tpu_custom_call.1} parent=1 // pred_region
      %194 = vsyncadd [#allocation5], 0
      %s196 = sshll.u32 %s2, 4
      %s197 = int_to_ptr.hbm [resolvable:$true] %s196
      %199 = dma.smem_to_hbm [#allocation8], 16, %s197, [#allocation5]
    $region33: #{tpu_custom_call.1} parent=1 // pred_fallthru
      _
    // Predicated region
    $region34: #{tpu_custom_call.1} parent=1 // pred_check
      _
    $region35: #{tpu_custom_call.1} parent=1 // pred_check_branch
      %201 = sbr.rel (0) target = $region37
    $region36: #{tpu_custom_call.1} parent=1 // pred_region
      %203 = dma.done [#allocation5], 16
    $region37: #{tpu_custom_call.1} parent=1 // pred_fallthru
      _
    %204 = sfence
    %205 = vsyncpa [#allocation4], 1
    %206 = vsyncpa [#allocation7], 1
    %207 = vsyncpa [#allocation5], 1

</llo_original>
